<compile_context>
chip_gen: v7x
topology: tpu7x:2x2x1
jax: 0.10.0
libtpu: 0.0.40
codegen_flags: <defaults>
</compile_context>

<pallas_src>
import functools

import jax
import jax.numpy as jnp
from jax.experimental import pallas as pl
from jax.experimental.pallas import tpu as pltpu


def _self_entropy_kernel(logits_ref, avg_ref, acc_ref, *, n_total, tile_n):
    """One (tile_n, C) batch tile: accumulate sum over rows of softmax(x/0.1)."""
    i = pl.program_id(1)                       # reduction (batch-tile) axis

    @pl.when(i == 0)
    def _():
        acc_ref[...] = jnp.zeros_like(acc_ref)

    x = logits_ref[...]                        # (tile_n, C) f32

    # Numerically stable softmax(x / 0.1, axis=1); temperature folded into the
    # exp argument (one sub + one mul on the VPU, exp/recip on the EUP).
    z = (x - jnp.max(x, axis=1, keepdims=True)) * 10.0
    e = jnp.exp(z)
    inv = pl.reciprocal(jnp.sum(e, axis=1, keepdims=True), approx=True)  # EUP
    p = e * inv                                # (tile_n, C)

    # Mask rows of the (possibly partial) last tile that lie beyond N.
    # (jnp.where also squashes any NaN/Inf coming from padded garbage rows.)
    tile = pl.program_id(0) * pl.num_programs(1) + i
    row = tile * tile_n + jax.lax.broadcasted_iota(jnp.int32, p.shape, 0)
    p = jnp.where(row < n_total, p, 0.0)

    acc_ref[...] += jnp.sum(p, axis=0, keepdims=True)

    @pl.when(i == pl.num_programs(1) - 1)
    def _():
        avg_ref[0] = acc_ref[...]              # (1, C) partial sum, this split


def self_entropy(logits, *, tile_n=None):
    """logits: (N, C) float32. Returns (logits_avg (C,), loss (N, 1, C))."""
    N, C = logits.shape

    if tile_n is None:
        # Keep each double-buffered input tile to a few MiB of VMEM
        # (2 * tile_n * C * 4 B), comfortably inside every chip's budget.
        max_rows = max(8, (1 << 20) // max(C, 1))      # ~4 MiB per f32 buffer
        tile_n = N if N <= max_rows else (max_rows // 8) * 8

    n_tiles = pl.cdiv(N, tile_n)
    # Split batch tiles across the two v7x TensorCores when it divides evenly.
    n_split = 2 if (n_tiles >= 2 and n_tiles % 2 == 0) else 1
    t_per_split = n_tiles // n_split

    kernel = functools.partial(_self_entropy_kernel, n_total=N, tile_n=tile_n)

    partial = pl.pallas_call(
        kernel,
        out_shape=jax.ShapeDtypeStruct((n_split, 1, C), jnp.float32),
        grid=(n_split, t_per_split),
        in_specs=[
            pl.BlockSpec((tile_n, C), lambda s, i: (s * t_per_split + i, 0)),
        ],
        out_specs=pl.BlockSpec((1, 1, C), lambda s, i: (s, 0, 0)),
        scratch_shapes=[pltpu.VMEM((1, C), jnp.float32)],
        compiler_params=pltpu.CompilerParams(
            dimension_semantics=("parallel", "arbitrary"),
            vmem_limit_bytes=32 * 1024 * 1024,
        ),
    )(logits)

    logits_avg = jnp.sum(partial[:, 0, :], axis=0) / N

    # loss = -log_softmax(logits.unsqueeze(1), dim=1): softmax over a singleton
    # axis, so the result is exactly zero -- emitted as a cheap XLA fill, no
    # kernel work / HBM traffic. (PyTorch produces -0.0 here; we emit +0.0.)
    loss = jnp.zeros((N, 1, C), dtype=logits.dtype)

    # TODO(synk): the PyTorch forward has no return statement (returns None);
    # we return the computed intermediates instead so the kernel is testable.
    return logits_avg, loss


if __name__ == "__main__":
    key = jax.random.PRNGKey(0)

    # Case 1: small, lane-aligned, single tile (block == full array dims).
    N, C = 8, 128
    logits = jax.random.normal(key, (N, C), dtype=jnp.float32)
    logits_avg, loss = jax.jit(self_entropy)(logits)
    jax.block_until_ready((logits_avg, loss))

    ref_avg = jnp.mean(jax.nn.softmax(logits / 0.1, axis=1), axis=0)
    ref_loss = -jax.nn.log_softmax(logits[:, None, :], axis=1)
    assert logits_avg.shape == (C,)
    assert loss.shape == (N, 1, C)
    # approx=True EUP reciprocal -> slightly relaxed tolerance.
    assert jnp.allclose(logits_avg, ref_avg, atol=2e-3, rtol=2e-3)
    assert jnp.allclose(loss, ref_loss, atol=1e-6, rtol=1e-6)

    # Case 2: forced tiling with a partial last tile + two-way split
    # (exercises the accumulator, row masking and the parallel split axis).
    N2, C2 = 10, 128
    logits2 = jax.random.normal(jax.random.PRNGKey(1), (N2, C2), jnp.float32)
    avg2, loss2 = jax.jit(functools.partial(self_entropy, tile_n=8))(logits2)
    jax.block_until_ready((avg2, loss2))

    ref_avg2 = jnp.mean(jax.nn.softmax(logits2 / 0.1, axis=1), axis=0)
    assert avg2.shape == (C2,)
    assert loss2.shape == (N2, 1, C2)
    assert jnp.allclose(avg2, ref_avg2, atol=2e-3, rtol=2e-3)

    print("KERNEL_OK")
</pallas_src>

<mosaic_0001>
module attributes {stable_mosaic.version = 11 : i64} {
  func.func @_self_entropy_kernel(%arg0: i32, %arg1: i32, %arg2: memref<8x128xf32, #tpu.memory_space<vmem>>, %arg3: memref<1x1x128xf32, #tpu.memory_space<vmem>>, %arg4: memref<1x128xf32, #tpu.memory_space<vmem>>) attributes {dimension_semantics = [#tpu.dimension_semantics<parallel>, #tpu.dimension_semantics<arbitrary>], iteration_bounds = array<i64: 1, 1>, scalar_prefetch = 0 : i64, scratch_operands = 1 : i64, tpu.core_type = #tpu.core_type<tc>, window_params = [{transform_indices = @transform_0, window_bounds = array<i64: 8, 128>}, {transform_indices = @transform_1, window_bounds = array<i64: 1, 1, 128>}]} {
    %c0_i32 = arith.constant 0 : i32
    %0 = arith.cmpi eq, %arg1, %c0_i32 : i32
    %1 = arith.extui %0 : i1 to i32
    %c0_i32_0 = arith.constant 0 : i32
    %2 = arith.cmpi ne, %1, %c0_i32_0 : i32
    scf.if %2 {
      %cst_13 = arith.constant 0.000000e+00 : f32
      %34 = vector.broadcast %cst_13 : f32 to vector<1x128xf32>
      %c0_14 = arith.constant 0 : index
      %c0_15 = arith.constant 0 : index
      %35 = vector.load %arg4[%c0_14, %c0_15] : memref<1x128xf32, #tpu.memory_space<vmem>>, vector<1x128xf32>
      tpu.vector_store %arg4[%c0_14, %c0_15], %34 {strides = array<i32>} : memref<1x128xf32, #tpu.memory_space<vmem>>, vector<1x128xf32>,
    } else {
    }
    %c0 = arith.constant 0 : index
    %c0_1 = arith.constant 0 : index
    %3 = vector.load %arg2[%c0, %c0_1] : memref<8x128xf32, #tpu.memory_space<vmem>>, vector<8x128xf32>
    %cst = arith.constant dense<0xFF800000> : vector<8xf32>
    %4 = vector.multi_reduction <maximumf>, %3, %cst [1] : vector<8x128xf32> to vector<8xf32>
    %5 = vector.shape_cast %4 : vector<8xf32> to vector<8x1xf32>
    %6 = vector.broadcast %5 : vector<8x1xf32> to vector<8x128xf32>
    %7 = arith.subf %3, %6 : vector<8x128xf32>
    %cst_2 = arith.constant 1.000000e+01 : f32
    %8 = vector.broadcast %cst_2 : f32 to vector<8x128xf32>
    %9 = arith.mulf %7, %8 : vector<8x128xf32>
    %10 = math.exp %9 : vector<8x128xf32>
    %cst_3 = arith.constant dense<0.000000e+00> : vector<8xf32>
    %11 = vector.multi_reduction <add>, %10, %cst_3 [1] : vector<8x128xf32> to vector<8xf32>
    %12 = vector.shape_cast %11 : vector<8xf32> to vector<8x1xf32>
    %13 = tpu.reciprocal %12 {approx = true} : vector<8x1xf32> -> vector<8x1xf32>
    %14 = vector.broadcast %13 : vector<8x1xf32> to vector<8x128xf32>
    %15 = arith.mulf %10, %14 : vector<8x128xf32>
    %c1_i32 = arith.constant 1 : i32
    %16 = arith.muli %arg0, %c1_i32 : i32
    %17 = arith.addi %16, %arg1 : i32
    %c8_i32 = arith.constant 8 : i32
    %18 = arith.muli %17, %c8_i32 : i32
    %19 = tpu.iota {dimensions = array<i32: 0>} : vector<8x128xi32>
    %20 = vector.broadcast %18 : i32 to vector<8x128xi32>
    %21 = arith.addi %20, %19 : vector<8x128xi32>
    %c8_i32_4 = arith.constant 8 : i32
    %22 = vector.broadcast %c8_i32_4 : i32 to vector<8x128xi32>
    %23 = arith.cmpi slt, %21, %22 : vector<8x128xi32>
    %cst_5 = arith.constant 0.000000e+00 : f32
    %24 = vector.broadcast %cst_5 : f32 to vector<8x128xf32>
    %25 = arith.select %23, %15, %24 : vector<8x128xi1>, vector<8x128xf32>
    %c0_6 = arith.constant 0 : index
    %c0_7 = arith.constant 0 : index
    %26 = vector.load %arg4[%c0_6, %c0_7] : memref<1x128xf32, #tpu.memory_space<vmem>>, vector<1x128xf32>
    %cst_8 = arith.constant dense<0.000000e+00> : vector<128xf32>
    %27 = vector.multi_reduction <add>, %25, %cst_8 [0] : vector<8x128xf32> to vector<128xf32>
    %28 = vector.shape_cast %27 : vector<128xf32> to vector<1x128xf32>
    %29 = arith.addf %26, %28 : vector<1x128xf32>
    %c0_9 = arith.constant 0 : index
    %c0_10 = arith.constant 0 : index
    %30 = vector.load %arg4[%c0_9, %c0_10] : memref<1x128xf32, #tpu.memory_space<vmem>>, vector<1x128xf32>
    tpu.vector_store %arg4[%c0_9, %c0_10], %29 {strides = array<i32>} : memref<1x128xf32, #tpu.memory_space<vmem>>, vector<1x128xf32>,
    %c0_i32_11 = arith.constant 0 : i32
    %31 = arith.cmpi eq, %arg1, %c0_i32_11 : i32
    %32 = arith.extui %31 : i1 to i32
    %c0_i32_12 = arith.constant 0 : i32
    %33 = arith.cmpi ne, %32, %c0_i32_12 : i32
    scf.if %33 {
      %c0_13 = arith.constant 0 : index
      %c0_14 = arith.constant 0 : index
      %34 = vector.load %arg4[%c0_13, %c0_14] : memref<1x128xf32, #tpu.memory_space<vmem>>, vector<1x128xf32>
      %c0_15 = arith.constant 0 : index
      %c0_16 = arith.constant 0 : index
      %c0_17 = arith.constant 0 : index
      %35 = vector.load %arg3[%c0_15, %c0_16, %c0_17] : memref<1x1x128xf32, #tpu.memory_space<vmem>>, vector<1x1x128xf32>
      %36 = vector.shape_cast %35 : vector<1x1x128xf32> to vector<1x128xf32>
      %37 = vector.shape_cast %34 : vector<1x128xf32> to vector<1x1x128xf32>
      tpu.vector_store %arg3[%c0_15, %c0_16, %c0_17], %37 {strides = array<i32>} : memref<1x1x128xf32, #tpu.memory_space<vmem>>, vector<1x1x128xf32>,
    } else {
    }
    return
  }
  func.func @transform_0(%arg0: i32, %arg1: i32) -> (i32, i32) {
    %c1_i32 = arith.constant 1 : i32
    %0 = arith.muli %arg0, %c1_i32 : i32
    %1 = arith.addi %0, %arg1 : i32
    %c0_i32 = arith.constant 0 : i32
    %c0_i32_0 = arith.constant 0 : i32
    return %1, %c0_i32 : i32, i32
  }
  func.func @transform_1(%arg0: i32, %arg1: i32) -> (i32, i32, i32) {
    %c0_i32 = arith.constant 0 : i32
    %c0_i32_0 = arith.constant 0 : i32
    %c0_i32_1 = arith.constant 0 : i32
    return %arg0, %c0_i32, %c0_i32_0 : i32, i32, i32
  }
}

</mosaic_0001>

<llo_original>
// kernel: self_entropy.1
$region0: #{self_entropy.1}
  #allocation0 [shape = 'u32[]', space=smem, size = 0x4, offset = 0x4, fixed_abs, tag = 'smem constant byte address 0x4 - core index']
  #allocation1 [shape = 'u32[144,128]{1,0:T(1,128)}', space=vmem, size = 0x12000, scoped, tag = 'internal scratch']
  #allocation2 [shape = 'f32[1,128]{1,0:T(1,128)}', space=vmem, size = 0x200, scoped, tag = 'scratch operand']
  %s0 = inlined_call_operand.hbm [shape: f32[8,128], index: 0, kind: input, shape index: {}]
  %s1 = inlined_call_operand.vmem [shape: f32[1,1,128], index: 1, kind: output, shape index: {}]
  %s2 = sld [smem:[#allocation0]]
  $region26: #{self_entropy.1} parent=0
    _
  %s4 = ssub.s32 1, %s2
  %s5 = scalar_select 0, %s4, %s2
  $region1: #{self_entropy.1} parent=0
    #allocation3 [shape = 'u8[4096]{0}', space=vmem, size = 0x1000, scoped, tag = 'input window, operand 0, single buffered']
    #allocation4 [shape = 's32[1]{0}', space=sflag, size = 0x4, scoped, tag = 'scoped memory for self_entropy.1']
    %6 = vsyncpa [#allocation4], 0
    // Predicated region
    $region2: #{self_entropy.1} parent=1 // pred_check
      _
    $region3: #{self_entropy.1} parent=1 // pred_check_branch
      %8 = sbr.rel (0) target = $region5
    $region4: #{self_entropy.1} parent=1 // pred_region
      %s9 = sadd.s32 0, 0
      %s11 = ssub.s32 128, 128
      %12 = vsyncadd [#allocation4], %s11
      %s13 = smul.addr %s9, 128
      %s14 = scalar_lea.hbm %s0, %s13
      %s16 = sshll.u32 [#allocation3], 4
      %s17 = int_to_ptr.vmem [resolvable:$true] %s16
      %19 = dma.hbm_to_vmem [thread:$0]  %s14, 128, %s17, [#allocation4]
    $region5: #{self_entropy.1} parent=1 // pred_fallthru
      _
    // Predicated region
    $region6: #{self_entropy.1} parent=1 // pred_check
      _
    $region7: #{self_entropy.1} parent=1 // pred_check_branch
      %21 = sbr.rel (0) target = $region9
    $region8: #{self_entropy.1} parent=1 // pred_region
      %22 = dma.done [#allocation4], 128
    $region9: #{self_entropy.1} parent=1 // pred_fallthru
      _
    %s23 = sadd.s32 0, 0
    %p24 = scmp.eq.s32.totalorder 0, 0
    // Predicated region
    $region10: #{self_entropy.1} parent=1 // pred_check
      %p25 = pneg %p24
    $region11: #{self_entropy.1} parent=1 // pred_check_branch
      %27 = sbr.rel (%p25) target = $region13
    $region12: #{self_entropy.1} parent=1 // pred_region
      %28 = vst [vmem:[#allocation2] sm:$0x1] 0.0
    $region13: #{self_entropy.1} parent=1 // pred_fallthru
      _
    %v29 = vld [vmem:[#allocation3] sm:$0xff]
    %30 = vmax.xlane.f32.xlu0 %v29
    %v31 = vpop.xlane.xlu0 %30
    %v32 = vsub.f32 %v29, %v31
    %v33 = vmul.f32 %v32, 10.0
    %v34 = vmul.f32 %v33, 1.442695
    %v35 = vpow.pop %v34
    %36 = vadd.xlane.f32.xlu0 %v35
    %v37 = vpop.xlane.xlu0 %36
    %v38 = vrcp.pop %v37
    %v39 = vmul.f32 %v35, %v38
    %s40 = sadd.s32 0, 0
    %s41 = smul.u32 %s40, 8
    %v42 = vlaneseq
    %v43 = vshrl.u32 %v42, 7
    %v44 = vstv %s41
    %v45 = vadd.s32 %v44, %v43
    %vm46 = vcmp.lt.s32.totalorder %v45, 8
    %v47 = vsel %vm46, %v39, 0.0
    %v48 = vld [vmem:[#allocation2] sm:$0x1]
    %v49 = vrot.slane %v47, 4
    %v50 = vadd.f32 %v47, %v49
    %v51 = vrot.slane %v50, 2
    %v52 = vadd.f32 %v50, %v51
    %v53 = vrot.slane %v52, 1
    %v54 = vadd.f32 %v52, %v53
    %v55 = vadd.f32 %v48, %v54
    %56 = vst [vmem:[#allocation2] sm:$0x1] %v55
    // Predicated region
    $region14: #{self_entropy.1} parent=1 // pred_check
      %p57 = pneg %p24
    $region15: #{self_entropy.1} parent=1 // pred_check_branch
      %59 = sbr.rel (%p57) target = $region17
    $region16: #{self_entropy.1} parent=1 // pred_region
      %v60 = vld [vmem:[#allocation2] sm:$0x1]
      %61 = vst [vmem:[%s1] sm:$0x1] %v60
    $region17: #{self_entropy.1} parent=1 // pred_fallthru
      _
    // Predicated region
    $region18: #{self_entropy.1} parent=1 // pred_check
      _
    $region19: #{self_entropy.1} parent=1 // pred_check_branch
      %63 = sbr.rel (0) target = $region21
    $region20: #{self_entropy.1} parent=1 // pred_region
      _
    $region21: #{self_entropy.1} parent=1 // pred_fallthru
      _
    // Predicated region
    $region22: #{self_entropy.1} parent=1 // pred_check
      _
    $region23: #{self_entropy.1} parent=1 // pred_check_branch
      %65 = sbr.rel (0) target = $region25
    $region24: #{self_entropy.1} parent=1 // pred_region
      _
    $region25: #{self_entropy.1} parent=1 // pred_fallthru
      _
    %66 = vsyncpa [#allocation4], 1

</llo_original>
